<compile_context>
chip_gen: v7x
topology: tpu7x:2x2x1
jax: 0.10.0
libtpu: 0.0.40
codegen_flags: <defaults>
</compile_context>

<pallas_src>
import functools

import jax
import jax.numpy as jnp
from jax.experimental import pallas as pl
from jax.experimental.pallas import tpu as pltpu

_NEG_BIG = -1.0e30  # finite "-inf" for masked lanes (exp underflows to 0)


def _ce_label_smooth_kernel(
    logits_ref, targets_ref, out_ref, *,
    epsilon, num_classes, c_logical, n_total, block_n, mask_rows, mask_lanes,
):
    x = logits_ref[...].astype(jnp.float32)                  # (block_n, c_pad)
    bn, cp = x.shape
    tgt = targets_ref[...]                                   # (block_n, 1) int32

    cls_idx = jax.lax.broadcasted_iota(jnp.int32, (bn, cp), 1)

    if mask_lanes:
        lane_ok = cls_idx < c_logical
        x_sm = jnp.where(lane_ok, x, _NEG_BIG)                # for max / exp
        x_sum = jnp.where(lane_ok, x, 0.0)                    # for sum_c(x)
    else:
        x_sm = x
        x_sum = x

    # Numerically stable logsumexp over the class (lane) axis.
    m = jnp.max(x_sm, axis=1, keepdims=True)                  # (bn, 1)
    sumexp = jnp.sum(jnp.exp(x_sm - m), axis=1, keepdims=True)
    lse = m + jnp.log(sumexp)                                 # (bn, 1)

    # x[target] via masked select + lane reduce (padded lanes never match).
    x_t = jnp.sum(jnp.where(cls_idx == tgt, x, 0.0), axis=1, keepdims=True)
    s_x = jnp.sum(x_sum, axis=1, keepdims=True)

    row_loss = ((1.0 - epsilon) * (lse - x_t)
                + (epsilon / num_classes) * (jnp.float32(c_logical) * lse - s_x))

    if mask_rows:
        row_idx = (pl.program_id(0) * block_n
                   + jax.lax.broadcasted_iota(jnp.int32, (bn, 1), 0))
        row_loss = jnp.where(row_idx < n_total, row_loss, 0.0)

    block_loss = jnp.sum(row_loss)                            # scalar partial
    # Lane-dense, fully (8,128)-aligned store of the per-block partial.
    out_ref[...] = jnp.full(out_ref.shape, block_loss, dtype=jnp.float32)


def _round_up(x, m):
    return (x + m - 1) // m * m


def cross_entropy_label_smooth(logits, targets, *, num_classes, epsilon,
                               block_n=None):
    """logits: (N, C) float; targets: (N,) int class indices. Returns scalar f32."""
    n, c = logits.shape
    c_pad = _round_up(c, 128)

    if block_n is None:
        # ~2 MiB (f32-equivalent) per input tile; x2 double-buffer stays well
        # inside scoped VMEM on v5e/v6e (128 MiB) and v7x (64 MiB).
        tile_budget = 2 * 1024 * 1024
        rows = max(8, (tile_budget // (c_pad * 4)) // 8 * 8)
        block_n = min(rows, _round_up(n, 8))
    block_n = max(8, _round_up(block_n, 8))

    num_blocks = pl.cdiv(n, block_n)
    n_pad = num_blocks * block_n

    # Pad to lane/sublane-aligned shapes (masked out in-kernel).
    if (n_pad, c_pad) != (n, c):
        logits_p = jnp.zeros((n_pad, c_pad), logits.dtype).at[:n, :c].set(logits)
    else:
        logits_p = logits
    targets_col = jnp.zeros((n_pad, 1), jnp.int32).at[:n, 0].set(
        targets.astype(jnp.int32))

    kernel = functools.partial(
        _ce_label_smooth_kernel,
        epsilon=float(epsilon),
        num_classes=int(num_classes),
        c_logical=int(c),
        n_total=int(n),
        block_n=int(block_n),
        mask_rows=(n_pad != n),
        mask_lanes=(c_pad != c),
    )

    partials = pl.pallas_call(
        kernel,
        out_shape=jax.ShapeDtypeStruct((num_blocks, 8, 128), jnp.float32),
        grid=(num_blocks,),
        in_specs=[
            pl.BlockSpec((block_n, c_pad), lambda i: (i, 0)),
            pl.BlockSpec((block_n, 1), lambda i: (i, 0)),
        ],
        out_specs=pl.BlockSpec((1, 8, 128), lambda i: (i, 0, 0)),
        compiler_params=pltpu.CompilerParams(
            dimension_semantics=("parallel",),
            vmem_limit_bytes=32 * 1024 * 1024,
        ),
    )(logits_p, targets_col)

    # Tiny finalize in XLA: sum per-block partials, divide by the *global* N.
    return jnp.sum(partials[:, 0, 0]) / jnp.float32(n)


def _reference(logits, targets, *, num_classes, epsilon):
    log_probs = jax.nn.log_softmax(logits.astype(jnp.float32), axis=1)
    onehot = jax.nn.one_hot(targets, num_classes, dtype=jnp.float32)
    smoothed = (1.0 - epsilon) * onehot + epsilon / num_classes
    return jnp.sum(jnp.mean(-smoothed * log_probs, axis=0))


if __name__ == "__main__":
    epsilon = 0.1
    key = jax.random.PRNGKey(0)

    # Test A: lane/sublane-aligned shapes, single grid block.
    k1, k2, k3, k4 = jax.random.split(key, 4)
    n_a, c_a = 8, 128
    logits_a = jax.random.normal(k1, (n_a, c_a), dtype=jnp.float32)
    targets_a = jax.random.randint(k2, (n_a,), 0, c_a, dtype=jnp.int32)
    loss_a = cross_entropy_label_smooth(
        logits_a, targets_a, num_classes=c_a, epsilon=epsilon)
    loss_a = jax.block_until_ready(loss_a)
    ref_a = _reference(logits_a, targets_a, num_classes=c_a, epsilon=epsilon)
    assert jnp.allclose(loss_a, ref_a, atol=1e-5, rtol=1e-5), (loss_a, ref_a)

    # Test B: unaligned N and C, multiple grid blocks (row + lane masking paths).
    n_b, c_b = 13, 10
    logits_b = jax.random.normal(k3, (n_b, c_b), dtype=jnp.float32)
    targets_b = jax.random.randint(k4, (n_b,), 0, c_b, dtype=jnp.int32)
    loss_b = cross_entropy_label_smooth(
        logits_b, targets_b, num_classes=c_b, epsilon=epsilon, block_n=8)
    loss_b = jax.block_until_ready(loss_b)
    ref_b = _reference(logits_b, targets_b, num_classes=c_b, epsilon=epsilon)
    assert jnp.allclose(loss_b, ref_b, atol=1e-5, rtol=1e-5), (loss_b, ref_b)

    print("KERNEL_OK")
</pallas_src>

<mosaic_0001>
module attributes {stable_mosaic.version = 11 : i64} {
  func.func @_ce_label_smooth_kernel(%arg0: i32, %arg1: memref<8x128xf32, #tpu.memory_space<vmem>>, %arg2: memref<8x1xi32, #tpu.memory_space<vmem>>, %arg3: memref<1x8x128xf32, #tpu.memory_space<vmem>>) attributes {dimension_semantics = [#tpu.dimension_semantics<parallel>], iteration_bounds = array<i64: 1>, scalar_prefetch = 0 : i64, scratch_operands = 0 : i64, tpu.core_type = #tpu.core_type<tc>, window_params = [{transform_indices = @transform_0, window_bounds = array<i64: 8, 128>}, {transform_indices = @transform_1, window_bounds = array<i64: 8, 1>}, {transform_indices = @transform_2, window_bounds = array<i64: 1, 8, 128>}]} {
    %c0 = arith.constant 0 : index
    %c0_0 = arith.constant 0 : index
    %0 = vector.load %arg1[%c0, %c0_0] : memref<8x128xf32, #tpu.memory_space<vmem>>, vector<8x128xf32>
    %c0_1 = arith.constant 0 : index
    %c0_2 = arith.constant 0 : index
    %1 = vector.load %arg2[%c0_1, %c0_2] : memref<8x1xi32, #tpu.memory_space<vmem>>, vector<8x1xi32>
    %2 = tpu.iota {dimensions = array<i32: 1>} : vector<8x128xi32>
    %cst = arith.constant dense<0xFF800000> : vector<8xf32>
    %3 = vector.multi_reduction <maximumf>, %0, %cst [1] : vector<8x128xf32> to vector<8xf32>
    %4 = vector.shape_cast %3 : vector<8xf32> to vector<8x1xf32>
    %5 = vector.broadcast %4 : vector<8x1xf32> to vector<8x128xf32>
    %6 = arith.subf %0, %5 : vector<8x128xf32>
    %7 = math.exp %6 : vector<8x128xf32>
    %cst_3 = arith.constant dense<0.000000e+00> : vector<8xf32>
    %8 = vector.multi_reduction <add>, %7, %cst_3 [1] : vector<8x128xf32> to vector<8xf32>
    %9 = vector.shape_cast %8 : vector<8xf32> to vector<8x1xf32>
    %10 = math.log %9 : vector<8x1xf32>
    %11 = arith.addf %4, %10 : vector<8x1xf32>
    %12 = vector.broadcast %1 : vector<8x1xi32> to vector<8x128xi32>
    %13 = arith.cmpi eq, %2, %12 : vector<8x128xi32>
    %cst_4 = arith.constant 0.000000e+00 : f32
    %14 = vector.broadcast %cst_4 : f32 to vector<8x128xf32>
    %15 = arith.select %13, %0, %14 : vector<8x128xi1>, vector<8x128xf32>
    %cst_5 = arith.constant dense<0.000000e+00> : vector<8xf32>
    %16 = vector.multi_reduction <add>, %15, %cst_5 [1] : vector<8x128xf32> to vector<8xf32>
    %17 = vector.shape_cast %16 : vector<8xf32> to vector<8x1xf32>
    %cst_6 = arith.constant dense<0.000000e+00> : vector<8xf32>
    %18 = vector.multi_reduction <add>, %0, %cst_6 [1] : vector<8x128xf32> to vector<8xf32>
    %19 = vector.shape_cast %18 : vector<8xf32> to vector<8x1xf32>
    %20 = arith.subf %11, %17 : vector<8x1xf32>
    %cst_7 = arith.constant 0.899999976 : f32
    %21 = vector.broadcast %cst_7 : f32 to vector<8x1xf32>
    %22 = arith.mulf %21, %20 : vector<8x1xf32>
    %cst_8 = arith.constant 1.280000e+02 : f32
    %23 = vector.broadcast %cst_8 : f32 to vector<8x1xf32>
    %24 = arith.mulf %23, %11 : vector<8x1xf32>
    %25 = arith.subf %24, %19 : vector<8x1xf32>
    %cst_9 = arith.constant 7.812500e-04 : f32
    %26 = vector.broadcast %cst_9 : f32 to vector<8x1xf32>
    %27 = arith.mulf %26, %25 : vector<8x1xf32>
    %28 = arith.addf %22, %27 : vector<8x1xf32>
    %29 = vector.shape_cast %28 : vector<8x1xf32> to vector<1x8x1xf32>
    %cst_10 = arith.constant dense<0.000000e+00> : vector<1xf32>
    %30 = vector.multi_reduction <add>, %29, %cst_10 [1, 2] : vector<1x8x1xf32> to vector<1xf32>
    %31 = vector.shape_cast %30 : vector<1xf32> to vector<1x1x1xf32>
    %32 = vector.extract %31[0, 0, 0] : f32 from vector<1x1x1xf32>
    %33 = vector.broadcast %32 : f32 to vector<1x8x128xf32>
    %c0_11 = arith.constant 0 : index
    %c0_12 = arith.constant 0 : index
    %c0_13 = arith.constant 0 : index
    %34 = vector.load %arg3[%c0_11, %c0_12, %c0_13] : memref<1x8x128xf32, #tpu.memory_space<vmem>>, vector<1x8x128xf32>
    tpu.vector_store %arg3[%c0_11, %c0_12, %c0_13], %33 {strides = array<i32>} : memref<1x8x128xf32, #tpu.memory_space<vmem>>, vector<1x8x128xf32>,
    return
  }
  func.func @transform_0(%arg0: i32) -> (i32, i32) {
    %c0_i32 = arith.constant 0 : i32
    %c0_i32_0 = arith.constant 0 : i32
    return %arg0, %c0_i32 : i32, i32
  }
  func.func @transform_1(%arg0: i32) -> (i32, i32) {
    %c0_i32 = arith.constant 0 : i32
    %c0_i32_0 = arith.constant 0 : i32
    return %arg0, %c0_i32 : i32, i32
  }
  func.func @transform_2(%arg0: i32) -> (i32, i32, i32) {
    %c0_i32 = arith.constant 0 : i32
    %c0_i32_0 = arith.constant 0 : i32
    %c0_i32_1 = arith.constant 0 : i32
    return %arg0, %c0_i32, %c0_i32_0 : i32, i32, i32
  }
}

</mosaic_0001>

<llo_original>
// kernel: tpu_custom_call.1
$region0: #{tpu_custom_call.1}
  #allocation0 [shape = 'u32[]', space=smem, size = 0x4, offset = 0x4, fixed_abs, tag = 'smem constant byte address 0x4 - core index']
  #allocation1 [shape = 'u32[144,128]{1,0:T(1,128)}', space=vmem, size = 0x12000, scoped, tag = 'internal scratch']
  %s0 = inlined_call_operand.vmem [shape: f32[8,128], index: 0, kind: input, shape index: {}]
  %s1 = inlined_call_operand.vmem [shape: s32[8,1], index: 1, kind: input, shape index: {}]
  %s2 = inlined_call_operand.hbm [shape: f32[1,8,128], index: 2, kind: output, shape index: {}]
  %s3 = sld [smem:[#allocation0]]
  $region18: #{tpu_custom_call.1} parent=0
    _
  %s5 = ssub.s32 1, %s3
  %s6 = scalar_select 0, %s5, %s3
  $region1: #{tpu_custom_call.1} parent=0
    #allocation2 [shape = 'u8[4096]{0}', space=vmem, size = 0x1000, scoped, tag = 'output window, operand 0, single buffered']
    #allocation3 [shape = 's32[1]{0}', space=sflag, size = 0x4, scoped, tag = 'scoped memory for tpu_custom_call.1']
    %7 = vsyncpa [#allocation3], 0
    // Predicated region
    $region2: #{tpu_custom_call.1} parent=1 // pred_check
      _
    $region3: #{tpu_custom_call.1} parent=1 // pred_check_branch
      %9 = sbr.rel (0) target = $region5
    $region4: #{tpu_custom_call.1} parent=1 // pred_region
      _
    $region5: #{tpu_custom_call.1} parent=1 // pred_fallthru
      _
    // Predicated region
    $region6: #{tpu_custom_call.1} parent=1 // pred_check
      _
    $region7: #{tpu_custom_call.1} parent=1 // pred_check_branch
      %11 = sbr.rel (0) target = $region9
    $region8: #{tpu_custom_call.1} parent=1 // pred_region
      _
    $region9: #{tpu_custom_call.1} parent=1 // pred_fallthru
      _
    %v12 = vld [vmem:[%s0] sm:$0xff]
    %v13 = vld [vmem:[%s1] sm:$0xff]
    %v14 = vlaneseq
    %v15 = vand.u32 %v14, 127
    %16 = vmax.xlane.f32.xlu0 %v12
    %v17 = vpop.xlane.xlu0 %16
    %v18 = vsub.f32 %v12, %v17
    %v19 = vmul.f32 %v18, 1.442695
    %v20 = vpow.pop %v19
    %21 = vadd.xlane.f32.xlu0 %v20
    %v22 = vpop.xlane.xlu0 %21
    %v23 = vlog2.pop %v22
    %v24 = vmul.f32 %v23, 0.6931472
    %v25 = vadd.f32 %v17, %v24
    %26 = vset.pattern.permute.xlu0 0
    %27 = vperm.xlu0 %26, %v13
    %v28 = vpop.permute.xlu0 %27
    %vm29 = vcmp.eq.s32.totalorder %v15, %v28
    %v30 = vsel %vm29, %v12, 0.0
    %31 = vadd.xlane.f32.xlu0 %v30
    %v32 = vpop.xlane.xlu0 %31
    %33 = vadd.xlane.f32.xlu0 %v12
    %v34 = vpop.xlane.xlu0 %33
    %v35 = vsub.f32 %v25, %v32
    %v36 = vmul.f32 %v35, 0.9
    %v37 = vmul.f32 %v25, 128.0
    %v38 = vsub.f32 %v37, %v34
    %v39 = vmul.f32 %v38, 0.00078125
    %v40 = vadd.f32 %v36, %v39
    %vm41 = vcmask 7168
    %v42 = vsel %vm41, %v40, 0.0
    %43 = vadd.xlane.f32.xlu0 %v42
    %v44 = vpop.xlane.xlu0 %43
    %v45 = vrot.slane %v44, 4
    %v46 = vadd.f32 %v44, %v45
    %v47 = vrot.slane %v46, 2
    %v48 = vadd.f32 %v46, %v47
    %v49 = vrot.slane %v48, 1
    %v50 = vadd.f32 %v48, %v49
    %s51 = vtos %v50
    %v52 = vstv %s51
    %53 = vst [vmem:[#allocation2] sm:$0xff] %v52
    // Predicated region
    $region10: #{tpu_custom_call.1} parent=1 // pred_check
      _
    $region11: #{tpu_custom_call.1} parent=1 // pred_check_branch
      %55 = sbr.rel (0) target = $region13
    $region12: #{tpu_custom_call.1} parent=1 // pred_region
      %s57 = ssub.s32 128, 128
      %58 = vsyncadd [#allocation3], %s57
      %s60 = sshll.u32 [#allocation2], 4
      %s61 = int_to_ptr.vmem [resolvable:$true] %s60
      %63 = dma.vmem_to_hbm [thread:$0]  %s61, 128, %s2, [#allocation3]
    $region13: #{tpu_custom_call.1} parent=1 // pred_fallthru
      _
    // Predicated region
    $region14: #{tpu_custom_call.1} parent=1 // pred_check
      _
    $region15: #{tpu_custom_call.1} parent=1 // pred_check_branch
      %65 = sbr.rel (0) target = $region17
    $region16: #{tpu_custom_call.1} parent=1 // pred_region
      %66 = dma.done [#allocation3], 128
    $region17: #{tpu_custom_call.1} parent=1 // pred_fallthru
      _
    %67 = vsyncpa [#allocation3], 1

</llo_original>
